<compile_context>
chip_gen: v7x
topology: tpu7x:2x2x1
jax: 0.10.0
libtpu: 0.0.40
codegen_flags: <defaults>
</compile_context>

<pallas_src>
import jax
import jax.numpy as jnp
from jax.experimental import pallas as pl
from jax.experimental.pallas import tpu as pltpu


def _round_up(x, m):
    return (x + m - 1) // m * m


def _folded_kernel(x_ref, w_ref, b_ref, o_ref):
    """logits = x @ W_comb + b_comb  (linear stub folded; single MXU matmul)."""
    o_ref[...] = (
        jnp.dot(x_ref[...], w_ref[...], preferred_element_type=jnp.float32)
        + b_ref[...]
    )


def _fused_kernel(x_ref, wbb_ref, wfc_ref, bfc_ref, o_ref):
    """logits = (x @ Wbb) @ Wfc + b_total; the (bb, F) features never leave VMEM.

    Used when the backbone is NOT foldable (real nonlinear backbone).  The
    backbone bias is already folded into bfc at init, so no per-tile bias add
    on the (bb, F) intermediate.
    """
    feats = jnp.dot(x_ref[...], wbb_ref[...], preferred_element_type=jnp.float32)
    o_ref[...] = (
        jnp.dot(feats.astype(jnp.bfloat16), wfc_ref[...],
                preferred_element_type=jnp.float32)
        + bfc_ref[...]
    )


def init_params(key, in_channels, feat_dim=2048, num_classes=65,
                fold_linear_stub=True):
    """Returns (params, ref_params).

    params:     kernel-layout tensors (pre-padded, pre-transposed, bf16 weights,
                f32 biases).  With fold_linear_stub=True the linear backbone
                stub is folded through fc (biggest wall-clock win; only valid
                while the stub is linear).
    ref_params: unpadded f32 tensors (PyTorch-style layout) for reference math.
    """
    k1, k2, k3, k4 = jax.random.split(key, 4)
    # synthetic backbone projection: C -> feat_dim
    bw = jax.random.normal(k1, (in_channels, feat_dim), jnp.float32) * 0.02
    bbias = jax.random.normal(k2, (feat_dim,), jnp.float32) * 0.02
    # fc: Linear(feat_dim, num_classes); PyTorch stores (out, in)
    fw = jax.random.normal(k3, (num_classes, feat_dim), jnp.float32) * 0.02
    fb = jax.random.normal(k4, (num_classes,), jnp.float32) * 0.02

    Cp = _round_up(in_channels, 128)
    Np = _round_up(num_classes, 128)

    # Backbone bias folded through fc, in f32 (exact while the stub is linear).
    b_total = bbias @ fw.T + fb                                  # (num_classes,)
    b_pad = jnp.zeros((1, Np), jnp.float32).at[0, :num_classes].set(b_total)

    if fold_linear_stub:
        # TODO(synk): revert this fold when a real nonlinear backbone lands.
        w_comb = bw @ fw.T                                       # (C, num_classes) f32
        params = dict(
            w_comb=jnp.zeros((Cp, Np), jnp.bfloat16)
            .at[:in_channels, :num_classes].set(w_comb.astype(jnp.bfloat16)),
            b_comb=b_pad,
        )
    else:
        params = dict(
            backbone_w=jnp.zeros((Cp, feat_dim), jnp.bfloat16)
            .at[:in_channels, :].set(bw.astype(jnp.bfloat16)),
            fc_w=jnp.zeros((feat_dim, Np), jnp.bfloat16)
            .at[:, :num_classes].set(fw.T.astype(jnp.bfloat16)),
            fc_b=b_pad,
        )
    ref_params = dict(backbone_w=bw, backbone_b=bbias, fc_w=fw, fc_b=fb)
    return params, ref_params


def classifier_forward(params, x, num_classes=65, block_b=512):
    """x: (B, C, H, W) float32 (NCHW, like PyTorch).  Returns (B, num_classes) f32."""
    B, C = x.shape[0], x.shape[1]
    folded = "w_comb" in params
    if folded:
        w, b = params["w_comb"], params["b_comb"]
        Cp, Np = w.shape
        weight_bytes = w.size * 2 + b.size * 4
    else:
        wbb, wfc, bfc = params["backbone_w"], params["fc_w"], params["fc_b"]
        Cp, F = wbb.shape
        Np = wfc.shape[1]
        weight_bytes = wbb.size * 2 + wfc.size * 2 + bfc.size * 4

    # Synthetic backbone GAP: one XLA reduce feeding the kernel (output ~KiB here).
    # TODO(synk): if a real (B, 2048, 7, 7) NCHW backbone output feeds this,
    # reshape to a lane-dense (B, H*W, C) layout before reducing, or fuse the
    # GAP into the kernel, to avoid a layout-hostile reduce over the big tensor.
    pooled = jnp.mean(x, axis=(2, 3)).astype(jnp.bfloat16)          # (B, C) bf16

    # Batch tiling: pad only to the bf16 16-row sublane tile (no full-Bp slab),
    # and cap the tile at ceil(B/2) so the "parallel" axis has >=2 grid steps
    # (both v7x TensorCores engaged).  Remainder handled by partial last block.
    Bp = _round_up(B, 16)
    bb = max(16, min(_round_up(block_b, 16), _round_up(pl.cdiv(Bp, 2), 16)))
    bb = min(bb, Bp)
    grid = (pl.cdiv(Bp, bb),)

    # Only per-call pad: <=15 batch rows + the channel lane pad (bf16, tiny).
    xp = jnp.pad(pooled, ((0, Bp - B), (0, Cp - C)))                 # (Bp, Cp)

    # VMEM budget: resident weights x1 (Buffered(1)), double-buffered x/out tiles,
    # the (bb, F) f32 feats temp on the un-folded path, plus margin.
    vmem_limit = min(
        weight_bytes + 2 * bb * Cp * 2 + 2 * bb * Np * 4
        + (0 if folded else bb * F * 4) + (16 << 20),
        64 << 20)
    io_bytes = xp.size * 2 + Bp * Np * 4 + weight_bytes

    x_spec = pl.BlockSpec((bb, Cp), lambda i: (i, 0))
    out_spec = pl.BlockSpec((bb, Np), lambda i: (i, 0))
    # Resident (constant index_map) operands: single-buffered — halves weight VMEM.
    resident = lambda shape: pl.BlockSpec(shape, lambda i: (0, 0),
                                          pipeline_mode=pl.Buffered(1))

    if folded:
        kernel = _folded_kernel
        in_specs = [x_spec, resident((Cp, Np)), resident((1, Np))]
        operands = (xp, w, b)
        flops = 2 * Bp * Cp * Np
    else:
        kernel = _fused_kernel
        in_specs = [x_spec, resident((Cp, F)), resident((F, Np)), resident((1, Np))]
        operands = (xp, wbb, wfc, bfc)
        flops = 2 * Bp * (Cp * F + F * Np)

    out = pl.pallas_call(
        kernel,
        out_shape=jax.ShapeDtypeStruct((Bp, Np), jnp.float32),
        grid=grid,
        in_specs=in_specs,
        out_specs=out_spec,
        compiler_params=pltpu.CompilerParams(
            dimension_semantics=("parallel",),       # split B across TCs on v7x
            vmem_limit_bytes=int(vmem_limit),
        ),
        cost_estimate=pl.CostEstimate(
            flops=int(flops), transcendentals=0, bytes_accessed=int(io_bytes)),
    )(*operands)
    return out[:B, :num_classes]


if __name__ == "__main__":
    key = jax.random.PRNGKey(0)
    kx, kp = jax.random.split(key)

    B, C, H, W = 2, 4, 16, 16
    num_classes = 65
    x = jax.random.normal(kx, (B, C, H, W), jnp.float32)

    def reference(rp, x):
        feats = jnp.mean(x, axis=(2, 3)) @ rp["backbone_w"] + rp["backbone_b"]
        return feats @ rp["fc_w"].T + rp["fc_b"]

    # 1) default: linear stub folded into fc (single-matmul kernel).
    params, ref_params = init_params(kp, in_channels=C, feat_dim=2048,
                                     num_classes=num_classes, fold_linear_stub=True)
    out = jax.block_until_ready(classifier_forward(params, x, num_classes=num_classes))
    ref = reference(ref_params, x)
    assert out.shape == (B, num_classes)
    assert jnp.allclose(out, ref, atol=2e-2, rtol=2e-2), (
        float(jnp.max(jnp.abs(out - ref))))

    # 2) structural path (backbone proj + fc fused in-VMEM), for a future
    #    nonlinear backbone where the fold is invalid.
    params2, ref_params2 = init_params(kp, in_channels=C, feat_dim=2048,
                                       num_classes=num_classes, fold_linear_stub=False)
    out2 = jax.block_until_ready(classifier_forward(params2, x, num_classes=num_classes))
    ref2 = reference(ref_params2, x)
    assert out2.shape == (B, num_classes)
    assert jnp.allclose(out2, ref2, atol=2e-2, rtol=2e-2), (
        float(jnp.max(jnp.abs(out2 - ref2))))

    print("KERNEL_OK")
</pallas_src>

<mosaic_0001>
module attributes {stable_mosaic.version = 11 : i64} {
  func.func @_folded_kernel(%arg0: i32, %arg1: memref<16x128xbf16, #tpu.memory_space<vmem>>, %arg2: memref<128x128xbf16, #tpu.memory_space<vmem>>, %arg3: memref<1x128xf32, #tpu.memory_space<vmem>>, %arg4: memref<16x128xf32, #tpu.memory_space<vmem>>) attributes {dimension_semantics = [#tpu.dimension_semantics<parallel>], iteration_bounds = array<i64: 1>, scalar_prefetch = 0 : i64, scratch_operands = 0 : i64, tpu.core_type = #tpu.core_type<tc>, window_params = [{transform_indices = @transform_0, window_bounds = array<i64: 16, 128>}, {pipeline_mode = #tpu.pipeline_mode<synchronous>, transform_indices = @transform_1, window_bounds = array<i64: 128, 128>}, {pipeline_mode = #tpu.pipeline_mode<synchronous>, transform_indices = @transform_2, window_bounds = array<i64: 1, 128>}, {transform_indices = @transform_3, window_bounds = array<i64: 16, 128>}]} {
    %c0 = arith.constant 0 : index
    %c0_0 = arith.constant 0 : index
    %0 = vector.load %arg1[%c0, %c0_0] : memref<16x128xbf16, #tpu.memory_space<vmem>>, vector<16x128xbf16>
    %c0_1 = arith.constant 0 : index
    %c0_2 = arith.constant 0 : index
    %1 = vector.load %arg2[%c0_1, %c0_2] : memref<128x128xbf16, #tpu.memory_space<vmem>>, vector<128x128xbf16>
    %cst = arith.constant dense<0.000000e+00> : vector<16x128xf32>
    %2 = tpu.matmul %0, %1, %cst {dimension_numbers = #tpu.dot_dimension_numbers<[1], [0], [0], [1], [0, 0, 1, 1], [], []>} : vector<16x128xbf16>, vector<128x128xbf16>, vector<16x128xf32> -> vector<16x128xf32>
    %c0_3 = arith.constant 0 : index
    %c0_4 = arith.constant 0 : index
    %3 = vector.load %arg3[%c0_3, %c0_4] : memref<1x128xf32, #tpu.memory_space<vmem>>, vector<1x128xf32>
    %4 = vector.broadcast %3 : vector<1x128xf32> to vector<16x128xf32>
    %5 = arith.addf %2, %4 : vector<16x128xf32>
    %c0_5 = arith.constant 0 : index
    %c0_6 = arith.constant 0 : index
    %6 = vector.load %arg4[%c0_5, %c0_6] : memref<16x128xf32, #tpu.memory_space<vmem>>, vector<16x128xf32>
    tpu.vector_store %arg4[%c0_5, %c0_6], %5 {strides = array<i32>} : memref<16x128xf32, #tpu.memory_space<vmem>>, vector<16x128xf32>,
    return
  }
  func.func @transform_0(%arg0: i32) -> (i32, i32) {
    %c0_i32 = arith.constant 0 : i32
    %c0_i32_0 = arith.constant 0 : i32
    return %arg0, %c0_i32 : i32, i32
  }
  func.func @transform_1(%arg0: i32) -> (i32, i32) {
    %c0_i32 = arith.constant 0 : i32
    %c0_i32_0 = arith.constant 0 : i32
    %c0_i32_1 = arith.constant 0 : i32
    return %c0_i32, %c0_i32_0 : i32, i32
  }
  func.func @transform_2(%arg0: i32) -> (i32, i32) {
    %c0_i32 = arith.constant 0 : i32
    %c0_i32_0 = arith.constant 0 : i32
    %c0_i32_1 = arith.constant 0 : i32
    return %c0_i32, %c0_i32_0 : i32, i32
  }
  func.func @transform_3(%arg0: i32) -> (i32, i32) {
    %c0_i32 = arith.constant 0 : i32
    %c0_i32_0 = arith.constant 0 : i32
    return %arg0, %c0_i32 : i32, i32
  }
}

</mosaic_0001>

<llo_original>
// kernel: tpu_custom_call.1
$region0: #{tpu_custom_call.1}
  #allocation0 [shape = 'u32[]', space=smem, size = 0x4, offset = 0x4, fixed_abs, tag = 'smem constant byte address 0x4 - core index']
  #allocation1 [shape = 'u32[144,128]{1,0:T(1,128)}', space=vmem, size = 0x12000, scoped, tag = 'internal scratch']
  %s0 = inlined_call_operand.hbm [shape: bf16[16,128], index: 0, kind: input, shape index: {}]
  %s1 = inlined_call_operand.hbm [shape: bf16[128,128], index: 1, kind: input, shape index: {}]
  %s2 = inlined_call_operand.vmem [shape: f32[1,128], index: 2, kind: input, shape index: {}]
  %s3 = inlined_call_operand.hbm [shape: f32[16,128], index: 3, kind: output, shape index: {}]
  %s4 = sld [smem:[#allocation0]]
  $region30: #{tpu_custom_call.1} parent=0
    _
  %s6 = ssub.s32 1, %s4
  %s7 = scalar_select 0, %s6, %s4
  $region1: #{tpu_custom_call.1} parent=0
    #allocation2 [shape = 'u8[4096]{0}', space=vmem, size = 0x1000, scoped, tag = 'input window, operand 0, single buffered']
    #allocation3 [shape = 's32[1]{0}', space=sflag, size = 0x4, scoped, tag = 'scoped memory for tpu_custom_call.1']
    #allocation4 [shape = 's32[1]{0}', space=sflag, size = 0x4, scoped, tag = 'scoped memory for tpu_custom_call.1']
    #allocation5 [shape = 'u8[32768]{0}', space=vmem, size = 0x8000, scoped, tag = 'input window, operand 1, single buffered']
    #allocation6 [shape = 's32[1]{0}', space=sflag, size = 0x4, scoped, tag = 'scoped memory for tpu_custom_call.1']
    #allocation7 [shape = 'u8[8192]{0}', space=vmem, size = 0x2000, scoped, tag = 'output window, operand 0, single buffered']
    %8 = vsyncpa [#allocation3], 0
    %9 = vsyncpa [#allocation6], 0
    %10 = vsyncpa [#allocation4], 0
    // Predicated region
    $region2: #{tpu_custom_call.1} parent=1 // pred_check
      _
    $region3: #{tpu_custom_call.1} parent=1 // pred_check_branch
      %12 = sbr.rel (0) target = $region5
    $region4: #{tpu_custom_call.1} parent=1 // pred_region
      %s14 = ssub.s32 128, 128
      %15 = vsyncadd [#allocation3], %s14
      %s16 = sshll.u32 [#allocation2], 4
      %s17 = int_to_ptr.vmem [resolvable:$true] %s16
      %22 = dma.hbm_to_vmem [thread:$0]  %s0, 128, %s17, [#allocation3], 64, 64, 4
    $region5: #{tpu_custom_call.1} parent=1 // pred_fallthru
      _
    // Predicated region
    $region6: #{tpu_custom_call.1} parent=1 // pred_check
      _
    $region7: #{tpu_custom_call.1} parent=1 // pred_check_branch
      %24 = sbr.rel (0) target = $region9
    $region8: #{tpu_custom_call.1} parent=1 // pred_region
      %s26 = ssub.s32 1024, 1024
      %27 = vsyncadd [#allocation6], %s26
      %s28 = sshll.u32 [#allocation5], 4
      %s29 = int_to_ptr.vmem [resolvable:$true] %s28
      %34 = dma.hbm_to_vmem [thread:$0]  %s1, 1024, %s29, [#allocation6], 64, 64, 4
    $region9: #{tpu_custom_call.1} parent=1 // pred_fallthru
      _
    // Predicated region
    $region10: #{tpu_custom_call.1} parent=1 // pred_check
      _
    $region11: #{tpu_custom_call.1} parent=1 // pred_check_branch
      %36 = sbr.rel (0) target = $region13
    $region12: #{tpu_custom_call.1} parent=1 // pred_region
      _
    $region13: #{tpu_custom_call.1} parent=1 // pred_fallthru
      _
    // Predicated region
    $region14: #{tpu_custom_call.1} parent=1 // pred_check
      _
    $region15: #{tpu_custom_call.1} parent=1 // pred_check_branch
      %38 = sbr.rel (0) target = $region17
    $region16: #{tpu_custom_call.1} parent=1 // pred_region
      %39 = dma.done [#allocation3], 128
    $region17: #{tpu_custom_call.1} parent=1 // pred_fallthru
      _
    // Predicated region
    $region18: #{tpu_custom_call.1} parent=1 // pred_check
      _
    $region19: #{tpu_custom_call.1} parent=1 // pred_check_branch
      %41 = sbr.rel (0) target = $region21
    $region20: #{tpu_custom_call.1} parent=1 // pred_region
      %42 = dma.done [#allocation6], 1024
    $region21: #{tpu_custom_call.1} parent=1 // pred_fallthru
      _
    %v44 = vld [vmem:[#allocation2] sm:$0xf]
    %v45 = vld [vmem:[#allocation2 + $0x4] sm:$0xf]
    %v46 = vld [vmem:[#allocation5] sm:$0xf]
    %v47 = vld [vmem:[#allocation5 + $0x4] sm:$0xf]
    %v48 = vld [vmem:[#allocation5 + $0x8] sm:$0xf]
    %v49 = vld [vmem:[#allocation5 + $0xc] sm:$0xf]
    %v50 = vld [vmem:[#allocation5 + $0x10] sm:$0xf]
    %v51 = vld [vmem:[#allocation5 + $0x14] sm:$0xf]
    %v52 = vld [vmem:[#allocation5 + $0x18] sm:$0xf]
    %v53 = vld [vmem:[#allocation5 + $0x1c] sm:$0xf]
    %v54 = vld [vmem:[#allocation5 + $0x20] sm:$0xf]
    %v55 = vld [vmem:[#allocation5 + $0x24] sm:$0xf]
    %v56 = vld [vmem:[#allocation5 + $0x28] sm:$0xf]
    %v57 = vld [vmem:[#allocation5 + $0x2c] sm:$0xf]
    %v58 = vld [vmem:[#allocation5 + $0x30] sm:$0xf]
    %v59 = vld [vmem:[#allocation5 + $0x34] sm:$0xf]
    %v60 = vld [vmem:[#allocation5 + $0x38] sm:$0xf]
    %v61 = vld [vmem:[#allocation5 + $0x3c] sm:$0xf]
    %v62 = vld [vmem:[%s2] sm:$0x1]
    %v64 = vlaneseq
    %v65 = vshrl.u32 %v64, 7
    %v66 = vsub.s32 0, %v65
    %v67 = vrot.slane %v62, %v66
    %v71 = vunpack.c.l.b16 %v44
    %v72 = vunpack.c.l.b16 %v45
    %v73 = vpack.c.b16 %v72, %v71
    %v91 = vunpack.c.l.b16 %v46
    %v92 = vunpack.c.l.b16 %v47
    %v93 = vunpack.c.l.b16 %v48
    %v94 = vunpack.c.l.b16 %v49
    %v95 = vunpack.c.l.b16 %v50
    %v96 = vunpack.c.l.b16 %v51
    %v97 = vunpack.c.l.b16 %v52
    %v98 = vunpack.c.l.b16 %v53
    %v99 = vunpack.c.l.b16 %v54
    %v100 = vunpack.c.l.b16 %v55
    %v101 = vunpack.c.l.b16 %v56
    %v102 = vunpack.c.l.b16 %v57
    %v103 = vunpack.c.l.b16 %v58
    %v104 = vunpack.c.l.b16 %v59
    %v105 = vunpack.c.l.b16 %v60
    %v106 = vunpack.c.l.b16 %v61
    %v107 = vpack.c.b16 %v92, %v91
    %v108 = vpack.c.b16 %v94, %v93
    %v109 = vpack.c.b16 %v96, %v95
    %v110 = vpack.c.b16 %v98, %v97
    %v111 = vpack.c.b16 %v100, %v99
    %v112 = vpack.c.b16 %v102, %v101
    %v113 = vpack.c.b16 %v104, %v103
    %v114 = vpack.c.b16 %v106, %v105
    %123 = vmatprep.subr.bf16.mxu0 0
    %124 = vmatpush1.bf16.msra.mxu0 %v107
    %125 = vmatprep.subr.bf16.mxu0 0
    %126 = vmatpush1.bf16.msra.mxu0 %v108
    %127 = vmatprep.subr.bf16.mxu0 0
    %128 = vmatpush1.bf16.msra.mxu0 %v109
    %129 = vmatprep.subr.bf16.mxu0 0
    %130 = vmatpush1.bf16.msra.mxu0 %v110
    %131 = vmatprep.subr.bf16.mxu0 0
    %132 = vmatpush1.bf16.msra.mxu0 %v111
    %133 = vmatprep.subr.bf16.mxu0 0
    %134 = vmatpush1.bf16.msra.mxu0 %v112
    %135 = vmatprep.subr.bf16.mxu0 0
    %136 = vmatpush1.bf16.msra.mxu0 %v113
    %137 = vmatprep.subr.bf16.mxu0 0
    %138 = vmatpush1.bf16.msra.mxu0 %v114
    %139 = vmatprep.subr.bf16.mxu0 0
    %140 = vmatpush1.bf16.msra.mxu0 0
    %141 = vmatprep.subr.bf16.mxu0 0
    %142 = vmatpush1.bf16.msra.mxu0 0
    %143 = vmatprep.subr.bf16.mxu0 0
    %144 = vmatpush1.bf16.msra.mxu0 0
    %145 = vmatprep.subr.bf16.mxu0 0
    %146 = vmatpush1.bf16.msra.mxu0 0
    %147 = vmatprep.subr.bf16.mxu0 0
    %148 = vmatpush1.bf16.msra.mxu0 0
    %149 = vmatprep.subr.bf16.mxu0 0
    %150 = vmatpush1.bf16.msra.mxu0 0
    %151 = vmatprep.subr.bf16.mxu0 0
    %152 = vmatpush1.bf16.msra.mxu0 0
    %153 = vmatprep.subr.bf16.mxu0 0
    %154 = vmatpush1.bf16.msra.mxu0 0
    %155 = vmatprep.mubr.bf16.mxu0 0
    %156 = vmatmul.mubr.bf16.gmra.mrb[0].mxu0 %v73
    %v157 = vpop.f32.mrb[0].mxu0
    %v158 = vadd.f32 %v67, %v157
    %v159 = vpop.f32.mrb[0].mxu0
    %v160 = vpop.f32.mrb[0].mxu0
    %v161 = vadd.f32 %v67, %v160
    %v162 = vpop.f32.mrb[0].mxu0
    %163 = vdwg.mxu0
    %164 = vst [vmem:[#allocation7] sm:$0xff] %v158
    %165 = vst [vmem:[#allocation7 + $0x8] sm:$0xff] %v161
    // Predicated region
    $region22: #{tpu_custom_call.1} parent=1 // pred_check
      _
    $region23: #{tpu_custom_call.1} parent=1 // pred_check_branch
      %167 = sbr.rel (0) target = $region25
    $region24: #{tpu_custom_call.1} parent=1 // pred_region
      %s169 = ssub.s32 256, 256
      %170 = vsyncadd [#allocation4], %s169
      %s171 = sshll.u32 [#allocation7], 4
      %s172 = int_to_ptr.vmem [resolvable:$true] %s171
      %177 = dma.vmem_to_hbm [thread:$0]  %s172, 256, %s3, [#allocation4], 128, 128, 8
    $region25: #{tpu_custom_call.1} parent=1 // pred_fallthru
      _
    // Predicated region
    $region26: #{tpu_custom_call.1} parent=1 // pred_check
      _
    $region27: #{tpu_custom_call.1} parent=1 // pred_check_branch
      %179 = sbr.rel (0) target = $region29
    $region28: #{tpu_custom_call.1} parent=1 // pred_region
      %180 = dma.done [#allocation4], 256
    $region29: #{tpu_custom_call.1} parent=1 // pred_fallthru
      _
    %181 = vsyncpa [#allocation3], 1
    %182 = vsyncpa [#allocation6], 1
    %183 = vsyncpa [#allocation4], 1

</llo_original>
